<compile_context>
chip_gen: v6e
topology: v6e:2x2x1
jax: 0.10.0
libtpu: 0.0.40
codegen_flags: <defaults>
</compile_context>

<pallas_src>
import jax
import jax.numpy as jnp
from jax.experimental import pallas as pl
from jax.experimental.pallas import tpu as pltpu


def _round_up(x, m):
    return ((x + m - 1) // m) * m


def _fused_head_kernel(x_ref, w_ref, b_ref, out_ref):
    # f32 -> bf16 cast on the VPU (hidden under the MXU), f32 accumulation,
    # f32 bias add, lane-dense f32 store.
    x_bf = x_ref[...].astype(jnp.bfloat16)
    acc = jnp.dot(x_bf, w_ref[...], preferred_element_type=jnp.float32)
    out_ref[...] = (acc + b_ref[...]).astype(out_ref.dtype)


def prepare_params(w_cls, b_cls, w_box, b_box):
    """One-time fusion of the two Linear heads (call once at init, reuse).

    Weights are stored pre-transposed [in, out].  Each head's output columns
    are zero-padded to a multiple of 128 lanes and then concatenated, so:
      * the fused GEMM output is lane-dense (width = multiple of 128),
      * the scores slab starts at column 0 and the bbox slab starts at a
        128-aligned column -> both extractions are contiguous slices.
    The fused weight is cast to bf16 once here (MXU-native, half the HBM).
    """
    d, c = w_cls.shape
    c4 = w_box.shape[1]
    c_cls_pad = _round_up(c, 128)
    c_box_pad = _round_up(c4, 128)
    c_total = c_cls_pad + c_box_pad

    w = jnp.zeros((d, c_total), jnp.float32)
    w = w.at[:, :c].set(w_cls.astype(jnp.float32))
    w = w.at[:, c_cls_pad:c_cls_pad + c4].set(w_box.astype(jnp.float32))

    b = jnp.zeros((1, c_total), jnp.float32)
    b = b.at[0, :c].set(b_cls.astype(jnp.float32))
    b = b.at[0, c_cls_pad:c_cls_pad + c4].set(b_box.astype(jnp.float32))

    return dict(
        w=w.astype(jnp.bfloat16),   # fused, padded, bf16 weight [D, c_total]
        b=b,                        # fused, padded, f32 bias   [1, c_total]
        d=d, c=c, c4=c4,
        c_cls_pad=c_cls_pad, c_total=c_total,
    )


def fast_rcnn_predictor(x, params, *, tile_n=512):
    """Forward pass.  x: [N, D] float32.  Returns (scores [N,C], bbox [N,4C])."""
    n, d = x.shape
    assert d == params["d"], "feature dim mismatch"
    c, c4 = params["c"], params["c4"]
    c_cls_pad, c_total = params["c_cls_pad"], params["c_total"]
    w, b = params["w"], params["b"]

    # ---- row tiling: multiples of 128 (MXU M / bf16 sublanes); for small N a
    # single block covering the whole 16-row-padded array is used. For
    # realistic N (>= 2*tile_n) the grid has >=2 steps so v7x can use both TCs.
    tile_rows = max(128, _round_up(tile_n, 128))
    n_pad16 = _round_up(max(n, 16), 16)
    if n_pad16 <= tile_rows:
        tile_rows = n_pad16

    def _footprint(t):
        return (2 * t * d * 4           # x tile, f32, double-buffered
                + 2 * t * c_total * 4   # out tile, f32, double-buffered
                + d * c_total * 2       # fused W, bf16, resident (single buf)
                + c_total * 4)          # fused bias, f32

    # Cap the tile so the working set stays well inside v7x's 64 MiB VMEM/TC.
    while tile_rows > 128 and _footprint(tile_rows) > (40 << 20):
        tile_rows -= 128
    # TODO(synk): for very large D (>~8-16K flattened features) add a K grid
    # axis ("arbitrary", tk~512) with an f32 VMEM accumulator; for the module's
    # D=1024 the single-K design is optimal.

    n_pad = _round_up(max(n, tile_rows), tile_rows)
    if n_pad != n:
        x = jnp.pad(x, ((0, n_pad - n), (0, 0)))

    grid = (n_pad // tile_rows,)
    vmem_limit = int(min(48 << 20, max(32 << 20, _footprint(tile_rows) * 1.25)))

    cost = pl.CostEstimate(
        flops=2 * n_pad * d * c_total,
        transcendentals=0,
        bytes_accessed=(n_pad * d * 4          # x (f32 in)
                        + w.size * 2           # fused W (bf16)
                        + b.size * 4           # fused bias (f32)
                        + n_pad * c_total * 4  # out (f32)
                        ),
    )

    def _run(resident_kwargs):
        return pl.pallas_call(
            _fused_head_kernel,
            out_shape=jax.ShapeDtypeStruct((n_pad, c_total), jnp.float32),
            grid=grid,
            in_specs=[
                # activation tile: streamed / double-buffered over row grid
                pl.BlockSpec((tile_rows, d), lambda i: (i, 0)),
                # fused weight + bias: constant block index -> VMEM-resident
                pl.BlockSpec((d, c_total), lambda i: (0, 0), **resident_kwargs),
                pl.BlockSpec((1, c_total), lambda i: (0, 0), **resident_kwargs),
            ],
            out_specs=pl.BlockSpec((tile_rows, c_total), lambda i: (i, 0)),
            compiler_params=pltpu.CompilerParams(
                dimension_semantics=("parallel",),
                vmem_limit_bytes=vmem_limit,
            ),
            cost_estimate=cost,
        )(x, w, b)

    try:
        # Single-buffer the resident operands (fetched once -> no 2nd copy).
        out = _run(dict(pipeline_mode=pl.Buffered(1)))
    except Exception:
        # Fallback for jax builds that don't honor pipeline_mode here.
        out = _run({})

    scores = out[:n, :c]                               # starts at lane 0
    bbox_deltas = out[:n, c_cls_pad:c_cls_pad + c4]    # starts on a 128 lane
    return scores, bbox_deltas


def init_params(key, in_channels, num_classes):
    """nn.Linear default init: U(-1/sqrt(in), 1/sqrt(in)); weights [in, out]."""
    k1, k2, k3, k4 = jax.random.split(key, 4)
    bound = 1.0 / jnp.sqrt(jnp.float32(in_channels))
    w_cls = jax.random.uniform(k1, (in_channels, num_classes),
                               jnp.float32, -bound, bound)
    b_cls = jax.random.uniform(k2, (num_classes,), jnp.float32, -bound, bound)
    w_box = jax.random.uniform(k3, (in_channels, num_classes * 4),
                               jnp.float32, -bound, bound)
    b_box = jax.random.uniform(k4, (num_classes * 4,), jnp.float32, -bound, bound)
    return w_cls, b_cls, w_box, b_box


if __name__ == "__main__":
    key = jax.random.PRNGKey(0)
    k_x, k_p = jax.random.split(key)

    # Small shapes consistent with the module: N proposals x in_channels feats.
    N = 8
    IN_CHANNELS = 128
    NUM_CLASSES = 8

    x = jax.random.normal(k_x, (N, IN_CHANNELS), jnp.float32)
    w_cls, b_cls, w_box, b_box = init_params(k_p, IN_CHANNELS, NUM_CLASSES)

    # One-time head fusion (hoisted out of the per-call path).
    params = prepare_params(w_cls, b_cls, w_box, b_box)

    scores, bbox_deltas = fast_rcnn_predictor(x, params)
    scores = jax.block_until_ready(scores)
    bbox_deltas = jax.block_until_ready(bbox_deltas)

    # Reference: same math as nn.Linear with operands rounded to bf16 exactly
    # as the kernel sees them (accumulation and bias stay f32).
    xb = x.astype(jnp.bfloat16).astype(jnp.float32)
    wcb = w_cls.astype(jnp.bfloat16).astype(jnp.float32)
    wbb = w_box.astype(jnp.bfloat16).astype(jnp.float32)
    ref_scores = xb @ wcb + b_cls
    ref_bbox = xb @ wbb + b_box

    assert scores.shape == (N, NUM_CLASSES)
    assert bbox_deltas.shape == (N, NUM_CLASSES * 4)
    assert jnp.allclose(scores, ref_scores, atol=2e-2, rtol=2e-2)
    assert jnp.allclose(bbox_deltas, ref_bbox, atol=2e-2, rtol=2e-2)

    print("KERNEL_OK")
</pallas_src>

<mosaic_0001>
module attributes {stable_mosaic.version = 11 : i64} {
  func.func @_fused_head_kernel(%arg0: i32, %arg1: memref<16x128xf32, #tpu.memory_space<vmem>>, %arg2: memref<128x256xbf16, #tpu.memory_space<vmem>>, %arg3: memref<1x256xf32, #tpu.memory_space<vmem>>, %arg4: memref<16x256xf32, #tpu.memory_space<vmem>>) attributes {dimension_semantics = [#tpu.dimension_semantics<parallel>], iteration_bounds = array<i64: 1>, scalar_prefetch = 0 : i64, scratch_operands = 0 : i64, tpu.core_type = #tpu.core_type<tc>, window_params = [{transform_indices = @transform_0, window_bounds = array<i64: 16, 128>}, {pipeline_mode = #tpu.pipeline_mode<synchronous>, transform_indices = @transform_1, window_bounds = array<i64: 128, 256>}, {pipeline_mode = #tpu.pipeline_mode<synchronous>, transform_indices = @transform_2, window_bounds = array<i64: 1, 256>}, {transform_indices = @transform_3, window_bounds = array<i64: 16, 256>}]} {
    %c0 = arith.constant 0 : index
    %c0_0 = arith.constant 0 : index
    %0 = vector.load %arg1[%c0, %c0_0] : memref<16x128xf32, #tpu.memory_space<vmem>>, vector<16x128xf32>
    %1 = arith.truncf %0 : vector<16x128xf32> to vector<16x128xbf16>
    %c0_1 = arith.constant 0 : index
    %c0_2 = arith.constant 0 : index
    %2 = vector.load %arg2[%c0_1, %c0_2] : memref<128x256xbf16, #tpu.memory_space<vmem>>, vector<128x256xbf16>
    %cst = arith.constant dense<0.000000e+00> : vector<16x256xf32>
    %3 = tpu.matmul %1, %2, %cst {dimension_numbers = #tpu.dot_dimension_numbers<[1], [0], [0], [1], [0, 0, 1, 1], [], []>} : vector<16x128xbf16>, vector<128x256xbf16>, vector<16x256xf32> -> vector<16x256xf32>
    %c0_3 = arith.constant 0 : index
    %c0_4 = arith.constant 0 : index
    %4 = vector.load %arg3[%c0_3, %c0_4] : memref<1x256xf32, #tpu.memory_space<vmem>>, vector<1x256xf32>
    %5 = vector.broadcast %4 : vector<1x256xf32> to vector<16x256xf32>
    %6 = arith.addf %3, %5 : vector<16x256xf32>
    %c0_5 = arith.constant 0 : index
    %c0_6 = arith.constant 0 : index
    %7 = vector.load %arg4[%c0_5, %c0_6] : memref<16x256xf32, #tpu.memory_space<vmem>>, vector<16x256xf32>
    tpu.vector_store %arg4[%c0_5, %c0_6], %6 {strides = array<i32>} : memref<16x256xf32, #tpu.memory_space<vmem>>, vector<16x256xf32>,
    return
  }
  func.func @transform_0(%arg0: i32) -> (i32, i32) {
    %c0_i32 = arith.constant 0 : i32
    %c0_i32_0 = arith.constant 0 : i32
    return %arg0, %c0_i32 : i32, i32
  }
  func.func @transform_1(%arg0: i32) -> (i32, i32) {
    %c0_i32 = arith.constant 0 : i32
    %c0_i32_0 = arith.constant 0 : i32
    %c0_i32_1 = arith.constant 0 : i32
    return %c0_i32, %c0_i32_0 : i32, i32
  }
  func.func @transform_2(%arg0: i32) -> (i32, i32) {
    %c0_i32 = arith.constant 0 : i32
    %c0_i32_0 = arith.constant 0 : i32
    %c0_i32_1 = arith.constant 0 : i32
    return %c0_i32, %c0_i32_0 : i32, i32
  }
  func.func @transform_3(%arg0: i32) -> (i32, i32) {
    %c0_i32 = arith.constant 0 : i32
    %c0_i32_0 = arith.constant 0 : i32
    return %arg0, %c0_i32 : i32, i32
  }
}

module attributes {stable_mosaic.version = 11 : i64} {
  func.func @_fused_head_kernel(%arg0: i32, %arg1: memref<16x128xf32, #tpu.memory_space<vmem>>, %arg2: memref<128x256xbf16, #tpu.memory_space<vmem>>, %arg3: memref<1x256xf32, #tpu.memory_space<vmem>>, %arg4: memref<16x256xf32, #tpu.memory_space<vmem>>) attributes {dimension_semantics = [#tpu.dimension_semantics<parallel>], iteration_bounds = array<i64: 1>, scalar_prefetch = 0 : i64, scratch_operands = 0 : i64, tpu.core_type = #tpu.core_type<tc>, window_params = [{transform_indices = @transform_0, window_bounds = array<i64: 16, 128>}, {pipeline_mode = #tpu.pipeline_mode<synchronous>, transform_indices = @transform_1, window_bounds = array<i64: 128, 256>}, {pipeline_mode = #tpu.pipeline_mode<synchronous>, transform_indices = @transform_2, window_bounds = array<i64: 1, 256>}, {transform_indices = @transform_3, window_bounds = array<i64: 16, 256>}]} {
    %c0 = arith.constant 0 : index
    %c0_0 = arith.constant 0 : index
    %0 = vector.load %arg1[%c0, %c0_0] : memref<16x128xf32, #tpu.memory_space<vmem>>, vector<16x128xf32>
    %1 = arith.truncf %0 : vector<16x128xf32> to vector<16x128xbf16>
    %c0_1 = arith.constant 0 : index
    %c0_2 = arith.constant 0 : index
    %2 = vector.load %arg2[%c0_1, %c0_2] : memref<128x256xbf16, #tpu.memory_space<vmem>>, vector<128x256xbf16>
    %cst = arith.constant dense<0.000000e+00> : vector<16x256xf32>
    %3 = tpu.matmul %1, %2, %cst {dimension_numbers = #tpu.dot_dimension_numbers<[1], [0], [0], [1], [0, 0, 1, 1], [], []>} : vector<16x128xbf16>, vector<128x256xbf16>, vector<16x256xf32> -> vector<16x256xf32>
    %c0_3 = arith.constant 0 : index
    %c0_4 = arith.constant 0 : index
    %4 = vector.load %arg3[%c0_3, %c0_4] : memref<1x256xf32, #tpu.memory_space<vmem>>, vector<1x256xf32>
    %5 = vector.broadcast %4 : vector<1x256xf32> to vector<16x256xf32>
    %6 = arith.addf %3, %5 : vector<16x256xf32>
    %c0_5 = arith.constant 0 : index
    %c0_6 = arith.constant 0 : index
    %7 = vector.load %arg4[%c0_5, %c0_6] : memref<16x256xf32, #tpu.memory_space<vmem>>, vector<16x256xf32>
    tpu.vector_store %arg4[%c0_5, %c0_6], %6 {strides = array<i32>} : memref<16x256xf32, #tpu.memory_space<vmem>>, vector<16x256xf32>,
    return
  }
  func.func @transform_0(%arg0: i32) -> (i32, i32) {
    %c0_i32 = arith.constant 0 : i32
    %c0_i32_0 = arith.constant 0 : i32
    return %arg0, %c0_i32 : i32, i32
  }
  func.func @transform_1(%arg0: i32) -> (i32, i32) {
    %c0_i32 = arith.constant 0 : i32
    %c0_i32_0 = arith.constant 0 : i32
    %c0_i32_1 = arith.constant 0 : i32
    return %c0_i32, %c0_i32_0 : i32, i32
  }
  func.func @transform_2(%arg0: i32) -> (i32, i32) {
    %c0_i32 = arith.constant 0 : i32
    %c0_i32_0 = arith.constant 0 : i32
    %c0_i32_1 = arith.constant 0 : i32
    return %c0_i32, %c0_i32_0 : i32, i32
  }
  func.func @transform_3(%arg0: i32) -> (i32, i32) {
    %c0_i32 = arith.constant 0 : i32
    %c0_i32_0 = arith.constant 0 : i32
    return %arg0, %c0_i32 : i32, i32
  }
}

</mosaic_0001>

<llo_original>
// kernel: tpu_custom_call.1
$region0: #{tpu_custom_call.1}
  #allocation0 [shape = 'u32[]', space=smem, size = 0x4, offset = 0x4, fixed_abs, tag = 'smem constant byte address 0x4 - core index']
  #allocation1 [shape = 'u32[144,128]{1,0:T(1,128)}', space=vmem, size = 0x12000, scoped, tag = 'internal scratch']
  %s0 = inlined_call_operand.hbm [shape: f32[16,128], index: 0, kind: input, shape index: {}]
  %s1 = inlined_call_operand.hbm [shape: bf16[128,256], index: 1, kind: input, shape index: {}]
  %s2 = inlined_call_operand.vmem [shape: f32[1,256], index: 2, kind: input, shape index: {}]
  %s3 = inlined_call_operand.hbm [shape: f32[16,256], index: 3, kind: output, shape index: {}]
  %s4 = sld [smem:[#allocation0]]
  $region30: #{tpu_custom_call.1} parent=0
    _
  %s6 = ssub.s32 1, %s4
  %s7 = scalar_select 0, %s6, %s4
  $region1: #{tpu_custom_call.1} parent=0
    #allocation2 [shape = 'u8[8192]{0}', space=vmem, size = 0x2000, scoped, tag = 'input window, operand 0, single buffered']
    #allocation3 [shape = 's32[1]{0}', space=sflag, size = 0x4, scoped, tag = 'scoped memory for tpu_custom_call.1']
    #allocation4 [shape = 's32[1]{0}', space=sflag, size = 0x4, scoped, tag = 'scoped memory for tpu_custom_call.1']
    #allocation5 [shape = 'u8[65536]{0}', space=vmem, size = 0x10000, scoped, tag = 'input window, operand 1, single buffered']
    #allocation6 [shape = 's32[1]{0}', space=sflag, size = 0x4, scoped, tag = 'scoped memory for tpu_custom_call.1']
    #allocation7 [shape = 'u8[16384]{0}', space=vmem, size = 0x4000, scoped, tag = 'output window, operand 0, single buffered']
    %8 = vsyncpa [#allocation3], 0
    %9 = vsyncpa [#allocation6], 0
    %10 = vsyncpa [#allocation4], 0
    // Predicated region
    $region2: #{tpu_custom_call.1} parent=1 // pred_check
      _
    $region3: #{tpu_custom_call.1} parent=1 // pred_check_branch
      %12 = sbr.rel (0) target = $region5
    $region4: #{tpu_custom_call.1} parent=1 // pred_region
      %s14 = ssub.s32 256, 256
      %15 = vsyncadd [#allocation3], %s14
      %s16 = sshll.u32 [#allocation2], 4
      %s17 = int_to_ptr.vmem [resolvable:$true] %s16
      %22 = dma.hbm_to_vmem [thread:$0]  %s0, 256, %s17, [#allocation3], 128, 128, 8
    $region5: #{tpu_custom_call.1} parent=1 // pred_fallthru
      _
    // Predicated region
    $region6: #{tpu_custom_call.1} parent=1 // pred_check
      _
    $region7: #{tpu_custom_call.1} parent=1 // pred_check_branch
      %24 = sbr.rel (0) target = $region9
    $region8: #{tpu_custom_call.1} parent=1 // pred_region
      %s26 = ssub.s32 2048, 2048
      %27 = vsyncadd [#allocation6], %s26
      %s28 = sshll.u32 [#allocation5], 4
      %s29 = int_to_ptr.vmem [resolvable:$true] %s28
      %34 = dma.hbm_to_vmem [thread:$0]  %s1, 2048, %s29, [#allocation6], 128, 128, 8
    $region9: #{tpu_custom_call.1} parent=1 // pred_fallthru
      _
    // Predicated region
    $region10: #{tpu_custom_call.1} parent=1 // pred_check
      _
    $region11: #{tpu_custom_call.1} parent=1 // pred_check_branch
      %36 = sbr.rel (0) target = $region13
    $region12: #{tpu_custom_call.1} parent=1 // pred_region
      _
    $region13: #{tpu_custom_call.1} parent=1 // pred_fallthru
      _
    // Predicated region
    $region14: #{tpu_custom_call.1} parent=1 // pred_check
      _
    $region15: #{tpu_custom_call.1} parent=1 // pred_check_branch
      %38 = sbr.rel (0) target = $region17
    $region16: #{tpu_custom_call.1} parent=1 // pred_region
      %39 = dma.done [#allocation3], 256
    $region17: #{tpu_custom_call.1} parent=1 // pred_fallthru
      _
    // Predicated region
    $region18: #{tpu_custom_call.1} parent=1 // pred_check
      _
    $region19: #{tpu_custom_call.1} parent=1 // pred_check_branch
      %41 = sbr.rel (0) target = $region21
    $region20: #{tpu_custom_call.1} parent=1 // pred_region
      %42 = dma.done [#allocation6], 2048
    $region21: #{tpu_custom_call.1} parent=1 // pred_fallthru
      _
    %v44 = vld [vmem:[#allocation2] sm:$0xff]
    %v45 = vld [vmem:[#allocation2 + $0x8] sm:$0xff]
    %v46 = vpack.c.bf16 %v45, %v44
    %v47 = vld [vmem:[#allocation5] sm:$0xff]
    %v48 = vld [vmem:[#allocation5 + $0x8] sm:$0xff]
    %v49 = vld [vmem:[#allocation5 + $0x10] sm:$0xff]
    %v50 = vld [vmem:[#allocation5 + $0x18] sm:$0xff]
    %v51 = vld [vmem:[#allocation5 + $0x20] sm:$0xff]
    %v52 = vld [vmem:[#allocation5 + $0x28] sm:$0xff]
    %v53 = vld [vmem:[#allocation5 + $0x30] sm:$0xff]
    %v54 = vld [vmem:[#allocation5 + $0x38] sm:$0xff]
    %v55 = vld [vmem:[#allocation5 + $0x40] sm:$0xff]
    %v56 = vld [vmem:[#allocation5 + $0x48] sm:$0xff]
    %v57 = vld [vmem:[#allocation5 + $0x50] sm:$0xff]
    %v58 = vld [vmem:[#allocation5 + $0x58] sm:$0xff]
    %v59 = vld [vmem:[#allocation5 + $0x60] sm:$0xff]
    %v60 = vld [vmem:[#allocation5 + $0x68] sm:$0xff]
    %v61 = vld [vmem:[#allocation5 + $0x70] sm:$0xff]
    %v62 = vld [vmem:[#allocation5 + $0x78] sm:$0xff]
    %v63 = vld [vmem:[%s2] sm:$0x3]
    %v65 = vlaneseq
    %v66 = vshrl.u32 %v65, 7
    %v67 = vsub.s32 0, %v66
    %v68 = vrot.slane %v63, %v67
    %v69 = vlaneseq
    %v70 = vshrl.u32 %v69, 7
    %v71 = vsub.s32 1, %v70
    %v72 = vrot.slane %v63, %v71
    %v91 = vunpack.c.l.b16 %v47
    %v92 = vunpack.c.h.b16 %v47
    %v93 = vunpack.c.l.b16 %v48
    %v94 = vunpack.c.h.b16 %v48
    %v95 = vunpack.c.l.b16 %v49
    %v96 = vunpack.c.h.b16 %v49
    %v97 = vunpack.c.l.b16 %v50
    %v98 = vunpack.c.h.b16 %v50
    %v99 = vunpack.c.l.b16 %v51
    %v100 = vunpack.c.h.b16 %v51
    %v101 = vunpack.c.l.b16 %v52
    %v102 = vunpack.c.h.b16 %v52
    %v103 = vunpack.c.l.b16 %v53
    %v104 = vunpack.c.h.b16 %v53
    %v105 = vunpack.c.l.b16 %v54
    %v106 = vunpack.c.h.b16 %v54
    %v107 = vunpack.c.l.b16 %v55
    %v108 = vunpack.c.h.b16 %v55
    %v109 = vunpack.c.l.b16 %v56
    %v110 = vunpack.c.h.b16 %v56
    %v111 = vunpack.c.l.b16 %v57
    %v112 = vunpack.c.h.b16 %v57
    %v113 = vunpack.c.l.b16 %v58
    %v114 = vunpack.c.h.b16 %v58
    %v115 = vunpack.c.l.b16 %v59
    %v116 = vunpack.c.h.b16 %v59
    %v117 = vunpack.c.l.b16 %v60
    %v118 = vunpack.c.h.b16 %v60
    %v119 = vunpack.c.l.b16 %v61
    %v120 = vunpack.c.h.b16 %v61
    %v121 = vunpack.c.l.b16 %v62
    %v122 = vunpack.c.h.b16 %v62
    %v123 = vpack.c.b16 %v93, %v91
    %v124 = vpack.c.b16 %v94, %v92
    %v125 = vpack.c.b16 %v97, %v95
    %v126 = vpack.c.b16 %v98, %v96
    %v127 = vpack.c.b16 %v101, %v99
    %v128 = vpack.c.b16 %v102, %v100
    %v129 = vpack.c.b16 %v105, %v103
    %v130 = vpack.c.b16 %v106, %v104
    %v131 = vpack.c.b16 %v109, %v107
    %v132 = vpack.c.b16 %v110, %v108
    %v133 = vpack.c.b16 %v113, %v111
    %v134 = vpack.c.b16 %v114, %v112
    %v135 = vpack.c.b16 %v117, %v115
    %v136 = vpack.c.b16 %v118, %v116
    %v137 = vpack.c.b16 %v121, %v119
    %v138 = vpack.c.b16 %v122, %v120
    %155 = vmatprep.subr.bf16.mxu0 %v138
    %156 = vmatpush1.bf16.msra.mxu0 %v137
    %157 = vmatprep.subr.bf16.mxu0 %v136
    %158 = vmatpush1.bf16.msra.mxu0 %v135
    %159 = vmatprep.subr.bf16.mxu0 %v134
    %160 = vmatpush1.bf16.msra.mxu0 %v133
    %161 = vmatprep.subr.bf16.mxu0 %v132
    %162 = vmatpush1.bf16.msra.mxu0 %v131
    %163 = vmatprep.subr.bf16.mxu0 %v130
    %164 = vmatpush1.bf16.msra.mxu0 %v129
    %165 = vmatprep.subr.bf16.mxu0 %v128
    %166 = vmatpush1.bf16.msra.mxu0 %v127
    %167 = vmatprep.subr.bf16.mxu0 %v126
    %168 = vmatpush1.bf16.msra.mxu0 %v125
    %169 = vmatprep.subr.bf16.mxu0 %v124
    %170 = vmatpush1.bf16.msra.mxu0 %v123
    %171 = vmatprep.subr.bf16.mxu0 0
    %172 = vmatpush2.bf16.msra.mxu0 0
    %173 = vmatprep.subr.bf16.mxu0 0
    %174 = vmatpush2.bf16.msra.mxu0 0
    %175 = vmatprep.subr.bf16.mxu0 0
    %176 = vmatpush2.bf16.msra.mxu0 0
    %177 = vmatprep.subr.bf16.mxu0 0
    %178 = vmatpush2.bf16.msra.mxu0 0
    %179 = vmatprep.subr.bf16.mxu0 0
    %180 = vmatpush2.bf16.msra.mxu0 0
    %181 = vmatprep.subr.bf16.mxu0 0
    %182 = vmatpush2.bf16.msra.mxu0 0
    %183 = vmatprep.subr.bf16.mxu0 0
    %184 = vmatpush2.bf16.msra.mxu0 0
    %185 = vmatprep.subr.bf16.mxu0 0
    %186 = vmatpush2.bf16.msra.mxu0 0
    %187 = vmatprep.mubr.bf16.mxu0 0
    %188 = vmatmul.mubr.bf16.gmra.mxu0 %v46
    %v189 = vpop.f32.mrf.mxu0
    %v190 = vadd.f32 %v68, %v189
    %v191 = vpop.f32.mrf.mxu0
    %v192 = vadd.f32 %v72, %v191
    %v193 = vpop.f32.mrf.mxu0
    %v194 = vadd.f32 %v68, %v193
    %v195 = vpop.f32.mrf.mxu0
    %v196 = vadd.f32 %v72, %v195
    %197 = vdwg.mxu0
    %198 = vst [vmem:[#allocation7] sm:$0xff] %v190
    %199 = vst [vmem:[#allocation7 + $0x8] sm:$0xff] %v192
    %200 = vst [vmem:[#allocation7 + $0x10] sm:$0xff] %v194
    %201 = vst [vmem:[#allocation7 + $0x18] sm:$0xff] %v196
    // Predicated region
    $region22: #{tpu_custom_call.1} parent=1 // pred_check
      _
    $region23: #{tpu_custom_call.1} parent=1 // pred_check_branch
      %203 = sbr.rel (0) target = $region25
    $region24: #{tpu_custom_call.1} parent=1 // pred_region
      %s205 = ssub.s32 512, 512
      %206 = vsyncadd [#allocation4], %s205
      %s207 = sshll.u32 [#allocation7], 4
      %s208 = int_to_ptr.vmem [resolvable:$true] %s207
      %213 = dma.vmem_to_hbm [thread:$0]  %s208, 512, %s3, [#allocation4], 256, 256, 16
    $region25: #{tpu_custom_call.1} parent=1 // pred_fallthru
      _
    // Predicated region
    $region26: #{tpu_custom_call.1} parent=1 // pred_check
      _
    $region27: #{tpu_custom_call.1} parent=1 // pred_check_branch
      %215 = sbr.rel (0) target = $region29
    $region28: #{tpu_custom_call.1} parent=1 // pred_region
      %216 = dma.done [#allocation4], 512
    $region29: #{tpu_custom_call.1} parent=1 // pred_fallthru
      _
    %217 = vsyncpa [#allocation3], 1
    %218 = vsyncpa [#allocation6], 1
    %219 = vsyncpa [#allocation4], 1

// kernel: tpu_custom_call.1
$region0: #{tpu_custom_call.1}
  #allocation0 [shape = 'u32[]', space=smem, size = 0x4, offset = 0x4, fixed_abs, tag = 'smem constant byte address 0x4 - core index']
  #allocation1 [shape = 'u32[144,128]{1,0:T(1,128)}', space=vmem, size = 0x12000, scoped, tag = 'internal scratch']
  %s0 = inlined_call_operand.hbm [shape: f32[16,128], index: 0, kind: input, shape index: {}]
  %s1 = inlined_call_operand.hbm [shape: bf16[128,256], index: 1, kind: input, shape index: {}]
  %s2 = inlined_call_operand.vmem [shape: f32[1,256], index: 2, kind: input, shape index: {}]
  %s3 = inlined_call_operand.hbm [shape: f32[16,256], index: 3, kind: output, shape index: {}]
  %s4 = sld [smem:[#allocation0]]
  $region30: #{tpu_custom_call.1} parent=0
    _
  %s6 = ssub.s32 1, %s4
  %s7 = scalar_select 0, %s6, %s4
  $region1: #{tpu_custom_call.1} parent=0
    #allocation2 [shape = 'u8[8192]{0}', space=vmem, size = 0x2000, scoped, tag = 'input window, operand 0, single buffered']
    #allocation3 [shape = 's32[1]{0}', space=sflag, size = 0x4, scoped, tag = 'scoped memory for tpu_custom_call.1']
    #allocation4 [shape = 's32[1]{0}', space=sflag, size = 0x4, scoped, tag = 'scoped memory for tpu_custom_call.1']
    #allocation5 [shape = 'u8[65536]{0}', space=vmem, size = 0x10000, scoped, tag = 'input window, operand 1, single buffered']
    #allocation6 [shape = 's32[1]{0}', space=sflag, size = 0x4, scoped, tag = 'scoped memory for tpu_custom_call.1']
    #allocation7 [shape = 'u8[16384]{0}', space=vmem, size = 0x4000, scoped, tag = 'output window, operand 0, single buffered']
    %8 = vsyncpa [#allocation3], 0
    %9 = vsyncpa [#allocation6], 0
    %10 = vsyncpa [#allocation4], 0
    // Predicated region
    $region2: #{tpu_custom_call.1} parent=1 // pred_check
      _
    $region3: #{tpu_custom_call.1} parent=1 // pred_check_branch
      %12 = sbr.rel (0) target = $region5
    $region4: #{tpu_custom_call.1} parent=1 // pred_region
      %s14 = ssub.s32 256, 256
      %15 = vsyncadd [#allocation3], %s14
      %s16 = sshll.u32 [#allocation2], 4
      %s17 = int_to_ptr.vmem [resolvable:$true] %s16
      %22 = dma.hbm_to_vmem [thread:$0]  %s0, 256, %s17, [#allocation3], 128, 128, 8
    $region5: #{tpu_custom_call.1} parent=1 // pred_fallthru
      _
    // Predicated region
    $region6: #{tpu_custom_call.1} parent=1 // pred_check
      _
    $region7: #{tpu_custom_call.1} parent=1 // pred_check_branch
      %24 = sbr.rel (0) target = $region9
    $region8: #{tpu_custom_call.1} parent=1 // pred_region
      %s26 = ssub.s32 2048, 2048
      %27 = vsyncadd [#allocation6], %s26
      %s28 = sshll.u32 [#allocation5], 4
      %s29 = int_to_ptr.vmem [resolvable:$true] %s28
      %34 = dma.hbm_to_vmem [thread:$0]  %s1, 2048, %s29, [#allocation6], 128, 128, 8
    $region9: #{tpu_custom_call.1} parent=1 // pred_fallthru
      _
    // Predicated region
    $region10: #{tpu_custom_call.1} parent=1 // pred_check
      _
    $region11: #{tpu_custom_call.1} parent=1 // pred_check_branch
      %36 = sbr.rel (0) target = $region13
    $region12: #{tpu_custom_call.1} parent=1 // pred_region
      _
    $region13: #{tpu_custom_call.1} parent=1 // pred_fallthru
      _
    // Predicated region
    $region14: #{tpu_custom_call.1} parent=1 // pred_check
      _
    $region15: #{tpu_custom_call.1} parent=1 // pred_check_branch
      %38 = sbr.rel (0) target = $region17
    $region16: #{tpu_custom_call.1} parent=1 // pred_region
      %39 = dma.done [#allocation3], 256
    $region17: #{tpu_custom_call.1} parent=1 // pred_fallthru
      _
    // Predicated region
    $region18: #{tpu_custom_call.1} parent=1 // pred_check
      _
    $region19: #{tpu_custom_call.1} parent=1 // pred_check_branch
      %41 = sbr.rel (0) target = $region21
    $region20: #{tpu_custom_call.1} parent=1 // pred_region
      %42 = dma.done [#allocation6], 2048
    $region21: #{tpu_custom_call.1} parent=1 // pred_fallthru
      _
    %v44 = vld [vmem:[#allocation2] sm:$0xff]
    %v45 = vld [vmem:[#allocation2 + $0x8] sm:$0xff]
    %v46 = vpack.c.bf16 %v45, %v44
    %v47 = vld [vmem:[#allocation5] sm:$0xff]
    %v48 = vld [vmem:[#allocation5 + $0x8] sm:$0xff]
    %v49 = vld [vmem:[#allocation5 + $0x10] sm:$0xff]
    %v50 = vld [vmem:[#allocation5 + $0x18] sm:$0xff]
    %v51 = vld [vmem:[#allocation5 + $0x20] sm:$0xff]
    %v52 = vld [vmem:[#allocation5 + $0x28] sm:$0xff]
    %v53 = vld [vmem:[#allocation5 + $0x30] sm:$0xff]
    %v54 = vld [vmem:[#allocation5 + $0x38] sm:$0xff]
    %v55 = vld [vmem:[#allocation5 + $0x40] sm:$0xff]
    %v56 = vld [vmem:[#allocation5 + $0x48] sm:$0xff]
    %v57 = vld [vmem:[#allocation5 + $0x50] sm:$0xff]
    %v58 = vld [vmem:[#allocation5 + $0x58] sm:$0xff]
    %v59 = vld [vmem:[#allocation5 + $0x60] sm:$0xff]
    %v60 = vld [vmem:[#allocation5 + $0x68] sm:$0xff]
    %v61 = vld [vmem:[#allocation5 + $0x70] sm:$0xff]
    %v62 = vld [vmem:[#allocation5 + $0x78] sm:$0xff]
    %v63 = vld [vmem:[%s2] sm:$0x3]
    %v65 = vlaneseq
    %v66 = vshrl.u32 %v65, 7
    %v67 = vsub.s32 0, %v66
    %v68 = vrot.slane %v63, %v67
    %v69 = vlaneseq
    %v70 = vshrl.u32 %v69, 7
    %v71 = vsub.s32 1, %v70
    %v72 = vrot.slane %v63, %v71
    %v91 = vunpack.c.l.b16 %v47
    %v92 = vunpack.c.h.b16 %v47
    %v93 = vunpack.c.l.b16 %v48
    %v94 = vunpack.c.h.b16 %v48
    %v95 = vunpack.c.l.b16 %v49
    %v96 = vunpack.c.h.b16 %v49
    %v97 = vunpack.c.l.b16 %v50
    %v98 = vunpack.c.h.b16 %v50
    %v99 = vunpack.c.l.b16 %v51
    %v100 = vunpack.c.h.b16 %v51
    %v101 = vunpack.c.l.b16 %v52
    %v102 = vunpack.c.h.b16 %v52
    %v103 = vunpack.c.l.b16 %v53
    %v104 = vunpack.c.h.b16 %v53
    %v105 = vunpack.c.l.b16 %v54
    %v106 = vunpack.c.h.b16 %v54
    %v107 = vunpack.c.l.b16 %v55
    %v108 = vunpack.c.h.b16 %v55
    %v109 = vunpack.c.l.b16 %v56
    %v110 = vunpack.c.h.b16 %v56
    %v111 = vunpack.c.l.b16 %v57
    %v112 = vunpack.c.h.b16 %v57
    %v113 = vunpack.c.l.b16 %v58
    %v114 = vunpack.c.h.b16 %v58
    %v115 = vunpack.c.l.b16 %v59
    %v116 = vunpack.c.h.b16 %v59
    %v117 = vunpack.c.l.b16 %v60
    %v118 = vunpack.c.h.b16 %v60
    %v119 = vunpack.c.l.b16 %v61
    %v120 = vunpack.c.h.b16 %v61
    %v121 = vunpack.c.l.b16 %v62
    %v122 = vunpack.c.h.b16 %v62
    %v123 = vpack.c.b16 %v93, %v91
    %v124 = vpack.c.b16 %v94, %v92
    %v125 = vpack.c.b16 %v97, %v95
    %v126 = vpack.c.b16 %v98, %v96
    %v127 = vpack.c.b16 %v101, %v99
    %v128 = vpack.c.b16 %v102, %v100
    %v129 = vpack.c.b16 %v105, %v103
    %v130 = vpack.c.b16 %v106, %v104
    %v131 = vpack.c.b16 %v109, %v107
    %v132 = vpack.c.b16 %v110, %v108
    %v133 = vpack.c.b16 %v113, %v111
    %v134 = vpack.c.b16 %v114, %v112
    %v135 = vpack.c.b16 %v117, %v115
    %v136 = vpack.c.b16 %v118, %v116
    %v137 = vpack.c.b16 %v121, %v119
    %v138 = vpack.c.b16 %v122, %v120
    %155 = vmatprep.subr.bf16.mxu0 %v138
    %156 = vmatpush1.bf16.msra.mxu0 %v137
    %157 = vmatprep.subr.bf16.mxu0 %v136
    %158 = vmatpush1.bf16.msra.mxu0 %v135
    %159 = vmatprep.subr.bf16.mxu0 %v134
    %160 = vmatpush1.bf16.msra.mxu0 %v133
    %161 = vmatprep.subr.bf16.mxu0 %v132
    %162 = vmatpush1.bf16.msra.mxu0 %v131
    %163 = vmatprep.subr.bf16.mxu0 %v130
    %164 = vmatpush1.bf16.msra.mxu0 %v129
    %165 = vmatprep.subr.bf16.mxu0 %v128
    %166 = vmatpush1.bf16.msra.mxu0 %v127
    %167 = vmatprep.subr.bf16.mxu0 %v126
    %168 = vmatpush1.bf16.msra.mxu0 %v125
    %169 = vmatprep.subr.bf16.mxu0 %v124
    %170 = vmatpush1.bf16.msra.mxu0 %v123
    %171 = vmatprep.subr.bf16.mxu0 0
    %172 = vmatpush2.bf16.msra.mxu0 0
    %173 = vmatprep.subr.bf16.mxu0 0
    %174 = vmatpush2.bf16.msra.mxu0 0
    %175 = vmatprep.subr.bf16.mxu0 0
    %176 = vmatpush2.bf16.msra.mxu0 0
    %177 = vmatprep.subr.bf16.mxu0 0
    %178 = vmatpush2.bf16.msra.mxu0 0
    %179 = vmatprep.subr.bf16.mxu0 0
    %180 = vmatpush2.bf16.msra.mxu0 0
    %181 = vmatprep.subr.bf16.mxu0 0
    %182 = vmatpush2.bf16.msra.mxu0 0
    %183 = vmatprep.subr.bf16.mxu0 0
    %184 = vmatpush2.bf16.msra.mxu0 0
    %185 = vmatprep.subr.bf16.mxu0 0
    %186 = vmatpush2.bf16.msra.mxu0 0
    %187 = vmatprep.mubr.bf16.mxu0 0
    %188 = vmatmul.mubr.bf16.gmra.mxu0 %v46
    %v189 = vpop.f32.mrf.mxu0
    %v190 = vadd.f32 %v68, %v189
    %v191 = vpop.f32.mrf.mxu0
    %v192 = vadd.f32 %v72, %v191
    %v193 = vpop.f32.mrf.mxu0
    %v194 = vadd.f32 %v68, %v193
    %v195 = vpop.f32.mrf.mxu0
    %v196 = vadd.f32 %v72, %v195
    %197 = vdwg.mxu0
    %198 = vst [vmem:[#allocation7] sm:$0xff] %v190
    %199 = vst [vmem:[#allocation7 + $0x8] sm:$0xff] %v192
    %200 = vst [vmem:[#allocation7 + $0x10] sm:$0xff] %v194
    %201 = vst [vmem:[#allocation7 + $0x18] sm:$0xff] %v196
    // Predicated region
    $region22: #{tpu_custom_call.1} parent=1 // pred_check
      _
    $region23: #{tpu_custom_call.1} parent=1 // pred_check_branch
      %203 = sbr.rel (0) target = $region25
    $region24: #{tpu_custom_call.1} parent=1 // pred_region
      %s205 = ssub.s32 512, 512
      %206 = vsyncadd [#allocation4], %s205
      %s207 = sshll.u32 [#allocation7], 4
      %s208 = int_to_ptr.vmem [resolvable:$true] %s207
      %213 = dma.vmem_to_hbm [thread:$0]  %s208, 512, %s3, [#allocation4], 256, 256, 16
    $region25: #{tpu_custom_call.1} parent=1 // pred_fallthru
      _
    // Predicated region
    $region26: #{tpu_custom_call.1} parent=1 // pred_check
      _
    $region27: #{tpu_custom_call.1} parent=1 // pred_check_branch
      %215 = sbr.rel (0) target = $region29
    $region28: #{tpu_custom_call.1} parent=1 // pred_region
      %216 = dma.done [#allocation4], 512
    $region29: #{tpu_custom_call.1} parent=1 // pred_fallthru
      _
    %217 = vsyncpa [#allocation3], 1
    %218 = vsyncpa [#allocation6], 1
    %219 = vsyncpa [#allocation4], 1

</llo_original>
